<compile_context>
chip_gen: v7x
topology: tpu7x:2x2x1
jax: 0.10.0
libtpu: 0.0.40
codegen_flags: <defaults>
</compile_context>

<pallas_src>
import jax
import jax.numpy as jnp
from jax.experimental import pallas as pl
from jax.experimental.pallas import tpu as pltpu

# ---- problem sizes (small, consistent with the module) ----------------------
N, H, W, CIN = 2, 16, 16, 3          # batch, image height/width, RGB channels
NC = 4                               # number of classes
COUT = 5 + NC                        # [xc, yc, w, h, obj, cls0..cls3]
M = H * W                            # candidate boxes (one per pixel, 1x1 head)
NM = N * M                           # batch folded into the lane axis
SIZE = 16                            # AutoShape `size`; == (H, W) so letterbox is identity
CIN_P = 8                            # contraction padded to 8 (sublane multiple)
COUT_P = 16                          # head channels padded to 8-multiple sublanes
ROWS = 8                             # box tensor rows padded 6 -> 8 (clean vreg tiles)


# ---------------------------- fused kernel ------------------------------------
def autoshape_kernel(x_ref, w_ref, b_ref, a_ref, c_ref, hi_ref, invg_ref,
                     out_ref):
    # --- dt[0] + dt[1]: normalize (/255 folded into W) + 1x1 head + sigmoid ---
    x = x_ref[...].astype(jnp.float32).astype(jnp.bfloat16)       # (8, NM), exact
    y = jnp.dot(w_ref[...], x, preferred_element_type=jnp.float32)  # (16, NM) MXU
    y = jax.nn.sigmoid(y + b_ref[...])                            # bias col bcast, EUP

    # --- dt[2] linear decode on the MXU: rows = [x1, y1, x2, y2] pre-clip -----
    box = jnp.dot(a_ref[...], y, preferred_element_type=jnp.float32)  # (4, NM)
    box = jnp.minimum(jnp.maximum(box, 0.0), hi_ref[...])             # clip, whole-slab

    # --- conf = obj * best cls; first-max-wins argmax (scalar where operands) --
    obj = y[4:5, :]
    best = y[5:6, :]
    idx = jnp.zeros_like(best)
    for c in range(1, NC):
        ci = y[5 + c:6 + c, :]
        take = ci > best
        best = jnp.where(take, ci, best)
        idx = jnp.where(take, float(c), idx)        # scalar broadcast, no full_like
    conf = obj * best
    zrow = jnp.zeros_like(conf)

    # --- Detections: xyxy slab, xywh = C @ xyxy (MXU, conf/cls pass through) --
    xyxy = jnp.concatenate([box, conf, idx, zrow, zrow], axis=0)          # (8, NM)
    xywh = jnp.dot(c_ref[...], xyxy, preferred_element_type=jnp.float32)  # (8, NM)
    top = jnp.concatenate([xyxy, xywh], axis=0)                           # (16, NM)
    # *n variants = one whole-(16,NM) multiply; single merged (32, NM) store.
    out_ref[...] = jnp.concatenate([top, top * invg_ref[...]], axis=0)


# ---------------------------- wrapper (glue) ----------------------------------
def autoshape_forward(ims_hwc_u8, w_head, b_head):
    # dt[0] preprocess relayout (uint8, 1/4 the bytes of f32): channels on
    # sublanes (padded 3 -> 8), batch*pixels on lanes.
    # TODO(synk): general letterbox resize/pad has no clean Pallas equivalent;
    #             at size == (H, W) letterbox is the identity, so it is skipped.
    x = jnp.transpose(ims_hwc_u8, (3, 0, 1, 2)).reshape(CIN, NM)
    x = jnp.pad(x, ((0, CIN_P - CIN), (0, 0)))                     # (8, NM) uint8

    # fold /255 of the normalize pass into the head weights; bf16 for the MXU.
    w_t = jnp.zeros((COUT_P, CIN_P), jnp.float32).at[:COUT, :CIN].set(w_head.T / 255.0)
    w_t = w_t.astype(jnp.bfloat16)
    b_col = jnp.zeros((COUT_P, 1), jnp.float32).at[:COUT, 0].set(b_head)

    # constant decode matrix A: [x1,y1,x2,y2] = A @ sigmoid(head)
    a_np = [[0.0] * COUT_P for _ in range(4)]
    a_np[0][0], a_np[0][2] = float(W), -float(W) / 2.0   # x1 = W*xc - (W/2)*w
    a_np[1][1], a_np[1][3] = float(H), -float(H) / 2.0   # y1 = H*yc - (H/2)*h
    a_np[2][0], a_np[2][2] = float(W), float(W) / 2.0    # x2 = W*xc + (W/2)*w
    a_np[3][1], a_np[3][3] = float(H), float(H) / 2.0    # y2 = H*yc + (H/2)*h
    a_mat = jnp.array(a_np, jnp.float32)                  # (4, 16)

    # constant matrix C: xyxy2xywh on the clipped slab, conf/class identity rows
    c_np = [[0.0] * ROWS for _ in range(ROWS)]
    c_np[0][0] = c_np[0][2] = 0.5                         # x_center
    c_np[1][1] = c_np[1][3] = 0.5                         # y_center
    c_np[2][0], c_np[2][2] = -1.0, 1.0                    # width
    c_np[3][1], c_np[3][3] = -1.0, 1.0                    # height
    c_np[4][4] = 1.0                                      # conf passthrough
    c_np[5][5] = 1.0                                      # class passthrough
    c_mat = jnp.array(c_np, jnp.float32)                  # (8, 8)

    # clip upper bounds (lower bound is 0), scale_boxes with gain=1
    hi = jnp.array([[float(W)], [float(H)], [float(W)], [float(H)]], jnp.float32)

    # gn per image = [w, h, w, h, 1, 1]; reciprocal, stacked twice (xyxy + xywh)
    inv8 = [1.0 / W, 1.0 / H, 1.0 / W, 1.0 / H, 1.0, 1.0, 1.0, 1.0]
    inv_gn = jnp.array(inv8 + inv8, jnp.float32).reshape(2 * ROWS, 1)   # (16, 1)

    # TODO(synk): non_max_suppression has data-dependent output shapes (per-image
    #             variable #detections); all M candidates are kept instead.
    merged = pl.pallas_call(
        autoshape_kernel,
        out_shape=jax.ShapeDtypeStruct((4 * ROWS, NM), jnp.float32),
        grid=(1,),
        in_specs=[
            pl.BlockSpec((CIN_P, NM), lambda i: (0, 0)),        # image (uint8)
            pl.BlockSpec((COUT_P, CIN_P), lambda i: (0, 0)),    # W/255 (bf16)
            pl.BlockSpec((COUT_P, 1), lambda i: (0, 0)),        # bias
            pl.BlockSpec((4, COUT_P), lambda i: (0, 0)),        # xyxy decode matrix
            pl.BlockSpec((ROWS, ROWS), lambda i: (0, 0)),       # xyxy->xywh matrix
            pl.BlockSpec((4, 1), lambda i: (0, 0)),             # clip upper bounds
            pl.BlockSpec((2 * ROWS, 1), lambda i: (0, 0)),      # 1/gn
        ],
        out_specs=pl.BlockSpec((4 * ROWS, NM), lambda i: (0, 0)),
        compiler_params=pltpu.CompilerParams(
            dimension_semantics=("arbitrary",),
            allow_input_fusion=[True, False, False, False, False, False, False],
        ),
    )(x, w_t, b_col, a_mat, c_mat, hi, inv_gn)

    # single split + transpose to the PyTorch (N, M, 6) convention at the edge
    t = merged.reshape(4, ROWS, N, M)[:, :6]           # (4, 6, N, M)
    t = jnp.transpose(t, (0, 2, 3, 1))                 # (4, N, M, 6)
    return {"xyxy": t[0], "xywh": t[1], "xyxyn": t[2], "xywhn": t[3]}


# ---------------------------- main --------------------------------------------
if __name__ == "__main__":
    key = jax.random.PRNGKey(0)
    k_im, k_w, k_b = jax.random.split(key, 3)

    # deterministic synthetic inputs / weights
    # TODO(synk): the wrapped YOLOv5 backbone is external to AutoShape; a
    #             deterministic synthetic 1x1-conv detect head stands in.
    ims = jax.random.randint(k_im, (N, H, W, CIN), 0, 256, dtype=jnp.int32).astype(jnp.uint8)
    w_head = jax.random.normal(k_w, (CIN, COUT), jnp.float32) * 0.1
    b_head = jax.random.normal(k_b, (COUT,), jnp.float32) * 0.1

    out = jax.jit(autoshape_forward)(ims, w_head, b_head)
    out = jax.tree_util.tree_map(jax.block_until_ready, out)

    assert out["xyxy"].shape == (N, M, 6)
    assert all(v.shape == (N, M, 6) for v in out.values())
    assert all(v.dtype == jnp.float32 for v in out.values())
    print("KERNEL_OK")
</pallas_src>

<mosaic_0001>
module attributes {stable_mosaic.version = 11 : i64} {
  func.func @autoshape_kernel(%arg0: i32, %arg1: memref<8x512xi8, #tpu.memory_space<vmem>>, %arg2: memref<16x8xbf16, #tpu.memory_space<vmem>>, %arg3: memref<16x1xf32, #tpu.memory_space<vmem>>, %arg4: memref<4x16xf32, #tpu.memory_space<vmem>>, %arg5: memref<8x8xf32, #tpu.memory_space<vmem>>, %arg6: memref<4x1xf32, #tpu.memory_space<vmem>>, %arg7: memref<16x1xf32, #tpu.memory_space<vmem>>, %arg8: memref<32x512xf32, #tpu.memory_space<vmem>>) attributes {dimension_semantics = [#tpu.dimension_semantics<arbitrary>], iteration_bounds = array<i64: 1>, scalar_prefetch = 0 : i64, scratch_operands = 0 : i64, tpu.core_type = #tpu.core_type<tc>, window_params = [{pipeline_mode = #tpu.pipeline_mode<synchronous>, transform_indices = @transform_0, window_bounds = array<i64: 8, 512>}, {pipeline_mode = #tpu.pipeline_mode<synchronous>, transform_indices = @transform_1, window_bounds = array<i64: 16, 8>}, {pipeline_mode = #tpu.pipeline_mode<synchronous>, transform_indices = @transform_2, window_bounds = array<i64: 16, 1>}, {pipeline_mode = #tpu.pipeline_mode<synchronous>, transform_indices = @transform_3, window_bounds = array<i64: 4, 16>}, {pipeline_mode = #tpu.pipeline_mode<synchronous>, transform_indices = @transform_4, window_bounds = array<i64: 8, 8>}, {pipeline_mode = #tpu.pipeline_mode<synchronous>, transform_indices = @transform_5, window_bounds = array<i64: 4, 1>}, {pipeline_mode = #tpu.pipeline_mode<synchronous>, transform_indices = @transform_6, window_bounds = array<i64: 16, 1>}, {pipeline_mode = #tpu.pipeline_mode<synchronous>, transform_indices = @transform_7, window_bounds = array<i64: 32, 512>}]} {
    %c0 = arith.constant 0 : index
    %c0_0 = arith.constant 0 : index
    %0 = vector.load %arg1[%c0, %c0_0] : memref<8x512xi8, #tpu.memory_space<vmem>>, vector<8x512xi8>
    %1 = arith.uitofp %0 : vector<8x512xi8> to vector<8x512xf32>
    %2 = arith.truncf %1 : vector<8x512xf32> to vector<8x512xbf16>
    %c0_1 = arith.constant 0 : index
    %c0_2 = arith.constant 0 : index
    %3 = vector.load %arg2[%c0_1, %c0_2] : memref<16x8xbf16, #tpu.memory_space<vmem>>, vector<16x8xbf16>
    %cst = arith.constant dense<0.000000e+00> : vector<16x512xf32>
    %4 = tpu.matmul %3, %2, %cst {dimension_numbers = #tpu.dot_dimension_numbers<[1], [0], [0], [1], [0, 0, 1, 1], [], []>} : vector<16x8xbf16>, vector<8x512xbf16>, vector<16x512xf32> -> vector<16x512xf32>
    %c0_3 = arith.constant 0 : index
    %c0_4 = arith.constant 0 : index
    %5 = vector.load %arg3[%c0_3, %c0_4] : memref<16x1xf32, #tpu.memory_space<vmem>>, vector<16x1xf32>
    %6 = vector.broadcast %5 : vector<16x1xf32> to vector<16x512xf32>
    %7 = arith.addf %4, %6 : vector<16x512xf32>
    %8 = arith.negf %7 : vector<16x512xf32>
    %9 = math.exp %8 : vector<16x512xf32>
    %cst_5 = arith.constant 1.000000e+00 : f32
    %10 = vector.broadcast %cst_5 : f32 to vector<16x512xf32>
    %11 = arith.addf %10, %9 : vector<16x512xf32>
    %12 = arith.divf %10, %11 : vector<16x512xf32>
    %c0_6 = arith.constant 0 : index
    %c0_7 = arith.constant 0 : index
    %13 = vector.load %arg4[%c0_6, %c0_7] : memref<4x16xf32, #tpu.memory_space<vmem>>, vector<4x16xf32>
    %cst_8 = arith.constant dense<0.000000e+00> : vector<4x512xf32>
    %14 = tpu.matmul %13, %12, %cst_8 {dimension_numbers = #tpu.dot_dimension_numbers<[1], [0], [0], [1], [0, 0, 1, 1], [], []>} : vector<4x16xf32>, vector<16x512xf32>, vector<4x512xf32> -> vector<4x512xf32>
    %cst_9 = arith.constant 0.000000e+00 : f32
    %15 = vector.broadcast %cst_9 : f32 to vector<4x512xf32>
    %16 = arith.maximumf %14, %15 : vector<4x512xf32>
    %c0_10 = arith.constant 0 : index
    %c0_11 = arith.constant 0 : index
    %17 = vector.load %arg6[%c0_10, %c0_11] : memref<4x1xf32, #tpu.memory_space<vmem>>, vector<4x1xf32>
    %18 = vector.broadcast %17 : vector<4x1xf32> to vector<4x512xf32>
    %19 = arith.minimumf %16, %18 : vector<4x512xf32>
    %20 = vector.extract_strided_slice %12 {offsets = [4, 0], sizes = [1, 512], strides = [1, 1]} : vector<16x512xf32> to vector<1x512xf32>
    %21 = vector.extract_strided_slice %12 {offsets = [5, 0], sizes = [1, 512], strides = [1, 1]} : vector<16x512xf32> to vector<1x512xf32>
    %cst_12 = arith.constant 0.000000e+00 : f32
    %22 = vector.broadcast %cst_12 : f32 to vector<1x512xf32>
    %23 = vector.extract_strided_slice %12 {offsets = [6, 0], sizes = [1, 512], strides = [1, 1]} : vector<16x512xf32> to vector<1x512xf32>
    %24 = arith.cmpf ogt, %23, %21 : vector<1x512xf32>
    %25 = arith.select %24, %23, %21 : vector<1x512xi1>, vector<1x512xf32>
    %cst_13 = arith.constant 1.000000e+00 : f32
    %26 = vector.broadcast %cst_13 : f32 to vector<1x512xf32>
    %27 = arith.select %24, %26, %22 : vector<1x512xi1>, vector<1x512xf32>
    %28 = vector.extract_strided_slice %12 {offsets = [7, 0], sizes = [1, 512], strides = [1, 1]} : vector<16x512xf32> to vector<1x512xf32>
    %29 = arith.cmpf ogt, %28, %25 : vector<1x512xf32>
    %30 = arith.select %29, %28, %25 : vector<1x512xi1>, vector<1x512xf32>
    %cst_14 = arith.constant 2.000000e+00 : f32
    %31 = vector.broadcast %cst_14 : f32 to vector<1x512xf32>
    %32 = arith.select %29, %31, %27 : vector<1x512xi1>, vector<1x512xf32>
    %33 = vector.extract_strided_slice %12 {offsets = [8, 0], sizes = [1, 512], strides = [1, 1]} : vector<16x512xf32> to vector<1x512xf32>
    %34 = arith.cmpf ogt, %33, %30 : vector<1x512xf32>
    %35 = arith.select %34, %33, %30 : vector<1x512xi1>, vector<1x512xf32>
    %cst_15 = arith.constant 3.000000e+00 : f32
    %36 = vector.broadcast %cst_15 : f32 to vector<1x512xf32>
    %37 = arith.select %34, %36, %32 : vector<1x512xi1>, vector<1x512xf32>
    %38 = arith.mulf %20, %35 : vector<1x512xf32>
    %cst_16 = arith.constant 0.000000e+00 : f32
    %39 = vector.broadcast %cst_16 : f32 to vector<1x512xf32>
    %40 = tpu.concatenate %19, %38, %37, %39, %39 in 0 : vector<4x512xf32>, vector<1x512xf32>, vector<1x512xf32>, vector<1x512xf32>, vector<1x512xf32> -> vector<8x512xf32>
    %c0_17 = arith.constant 0 : index
    %c0_18 = arith.constant 0 : index
    %41 = vector.load %arg5[%c0_17, %c0_18] : memref<8x8xf32, #tpu.memory_space<vmem>>, vector<8x8xf32>
    %cst_19 = arith.constant dense<0.000000e+00> : vector<8x512xf32>
    %42 = tpu.matmul %41, %40, %cst_19 {dimension_numbers = #tpu.dot_dimension_numbers<[1], [0], [0], [1], [0, 0, 1, 1], [], []>} : vector<8x8xf32>, vector<8x512xf32>, vector<8x512xf32> -> vector<8x512xf32>
    %43 = tpu.concatenate %40, %42 in 0 : vector<8x512xf32>, vector<8x512xf32> -> vector<16x512xf32>
    %c0_20 = arith.constant 0 : index
    %c0_21 = arith.constant 0 : index
    %44 = vector.load %arg7[%c0_20, %c0_21] : memref<16x1xf32, #tpu.memory_space<vmem>>, vector<16x1xf32>
    %45 = vector.broadcast %44 : vector<16x1xf32> to vector<16x512xf32>
    %46 = arith.mulf %43, %45 : vector<16x512xf32>
    %47 = tpu.concatenate %43, %46 in 0 : vector<16x512xf32>, vector<16x512xf32> -> vector<32x512xf32>
    %c0_22 = arith.constant 0 : index
    %c0_23 = arith.constant 0 : index
    %48 = vector.load %arg8[%c0_22, %c0_23] : memref<32x512xf32, #tpu.memory_space<vmem>>, vector<32x512xf32>
    tpu.vector_store %arg8[%c0_22, %c0_23], %47 {strides = array<i32>} : memref<32x512xf32, #tpu.memory_space<vmem>>, vector<32x512xf32>,
    return
  }
  func.func @transform_0(%arg0: i32) -> (i32, i32) {
    %c0_i32 = arith.constant 0 : i32
    %c0_i32_0 = arith.constant 0 : i32
    %c0_i32_1 = arith.constant 0 : i32
    return %c0_i32, %c0_i32_0 : i32, i32
  }
  func.func @transform_1(%arg0: i32) -> (i32, i32) {
    %c0_i32 = arith.constant 0 : i32
    %c0_i32_0 = arith.constant 0 : i32
    %c0_i32_1 = arith.constant 0 : i32
    return %c0_i32, %c0_i32_0 : i32, i32
  }
  func.func @transform_2(%arg0: i32) -> (i32, i32) {
    %c0_i32 = arith.constant 0 : i32
    %c0_i32_0 = arith.constant 0 : i32
    %c0_i32_1 = arith.constant 0 : i32
    return %c0_i32, %c0_i32_0 : i32, i32
  }
  func.func @transform_3(%arg0: i32) -> (i32, i32) {
    %c0_i32 = arith.constant 0 : i32
    %c0_i32_0 = arith.constant 0 : i32
    %c0_i32_1 = arith.constant 0 : i32
    return %c0_i32, %c0_i32_0 : i32, i32
  }
  func.func @transform_4(%arg0: i32) -> (i32, i32) {
    %c0_i32 = arith.constant 0 : i32
    %c0_i32_0 = arith.constant 0 : i32
    %c0_i32_1 = arith.constant 0 : i32
    return %c0_i32, %c0_i32_0 : i32, i32
  }
  func.func @transform_5(%arg0: i32) -> (i32, i32) {
    %c0_i32 = arith.constant 0 : i32
    %c0_i32_0 = arith.constant 0 : i32
    %c0_i32_1 = arith.constant 0 : i32
    return %c0_i32, %c0_i32_0 : i32, i32
  }
  func.func @transform_6(%arg0: i32) -> (i32, i32) {
    %c0_i32 = arith.constant 0 : i32
    %c0_i32_0 = arith.constant 0 : i32
    %c0_i32_1 = arith.constant 0 : i32
    return %c0_i32, %c0_i32_0 : i32, i32
  }
  func.func @transform_7(%arg0: i32) -> (i32, i32) {
    %c0_i32 = arith.constant 0 : i32
    %c0_i32_0 = arith.constant 0 : i32
    %c0_i32_1 = arith.constant 0 : i32
    return %c0_i32, %c0_i32_0 : i32, i32
  }
}

</mosaic_0001>

<llo_original>
// kernel: autoshape_forward.2
$region0: #{autoshape_forward.2}
  #allocation0 [shape = 'u32[]', space=smem, size = 0x4, offset = 0x4, fixed_abs, tag = 'smem constant byte address 0x4 - core index']
  #allocation1 [shape = 'u32[144,128]{1,0:T(1,128)}', space=vmem, size = 0x12000, scoped, tag = 'internal scratch']
  #allocation2 [shape = 'u32[2048]{0}', space=vmem, size = 0x2000, scoped, tag = 'scoped memory for autoshape_forward.2']
  #allocation3 [shape = 'u32[2048]{0}', space=vmem, size = 0x2000, scoped, tag = 'scoped memory for autoshape_forward.2']
  #allocation4 [shape = 'u32[2048]{0}', space=vmem, size = 0x2000, scoped, tag = 'scoped memory for autoshape_forward.2']
  #allocation5 [shape = 'u32[2048]{0}', space=vmem, size = 0x2000, scoped, tag = 'scoped memory for autoshape_forward.2']
  #allocation6 [shape = 'u32[2048]{0}', space=vmem, size = 0x2000, scoped, tag = 'scoped memory for autoshape_forward.2']
  %s0 = inlined_call_operand.vmem [shape: bf16[16,8], index: 0, kind: input, shape index: {}]
  %s1 = inlined_call_operand.vmem [shape: f32[16,1], index: 1, kind: input, shape index: {}]
  %s2 = inlined_call_operand.vmem [shape: f32[4,16], index: 2, kind: input, shape index: {}]
  %s3 = inlined_call_operand.vmem [shape: f32[8,8], index: 3, kind: input, shape index: {}]
  %s4 = inlined_call_operand.vmem [shape: f32[4,1], index: 4, kind: input, shape index: {}]
  %s5 = inlined_call_operand.vmem [shape: f32[16,1], index: 5, kind: input, shape index: {}]
  %s6 = inlined_call_operand.vmem [shape: u8[3,512], index: 6, kind: input, shape index: {}]
  %s7 = inlined_call_operand.<no memory space> [shape: u8[], index: 7, kind: input, shape index: {}]
  %s8 = inlined_call_operand.vmem [shape: f32[32,512], index: 8, kind: output, shape index: {}]
  %s9 = sld [smem:[#allocation0]]
  $region38: #{autoshape_forward.2} parent=0
    _
  %s11 = ssub.s32 1, %s9
  %s12 = scalar_select 0, %s11, %s9
  %v13 = vstv %s7
  %v15 = vshra.s32 %v13, 0
  %v16 = vand.u32 %v15, 255
  $region1: #{autoshape_forward.2} parent=0
    #allocation7 [shape = 'u8[4096]{0}', space=vmem, size = 0x1000, dematerialized = true, scoped, tag = 'FusionAdapter Buffer %fusion.2 = u8[8,512]{1,0:T(8,128)(4,1)} fusion(%param_6.1, %param_7), kind=kLoop, calls=%fused_computation.8.clone, metadata={op_name="jit(autoshape_forward)/jit(_pad)/pad" stack_frame_id=9}']
    // Predicated region
    $region2: #{autoshape_forward.2} parent=1 // pred_check
      _
    $region3: #{autoshape_forward.2} parent=1 // pred_check_branch
      %18 = sbr.rel (0) target = $region5
    $region4: #{autoshape_forward.2} parent=1 // pred_region
      _
    $region5: #{autoshape_forward.2} parent=1 // pred_fallthru
      _
    // Predicated region
    $region6: #{autoshape_forward.2} parent=1 // pred_check
      _
    $region7: #{autoshape_forward.2} parent=1 // pred_check_branch
      %20 = sbr.rel (0) target = $region9
    $region8: #{autoshape_forward.2} parent=1 // pred_region
      _
    $region9: #{autoshape_forward.2} parent=1 // pred_fallthru
      _
    // Predicated region
    $region10: #{autoshape_forward.2} parent=1 // pred_check
      _
    $region11: #{autoshape_forward.2} parent=1 // pred_check_branch
      %22 = sbr.rel (0) target = $region13
    $region12: #{autoshape_forward.2} parent=1 // pred_region
      _
    $region13: #{autoshape_forward.2} parent=1 // pred_fallthru
      _
    // Predicated region
    $region14: #{autoshape_forward.2} parent=1 // pred_check
      _
    $region15: #{autoshape_forward.2} parent=1 // pred_check_branch
      %24 = sbr.rel (0) target = $region17
    $region16: #{autoshape_forward.2} parent=1 // pred_region
      _
    $region17: #{autoshape_forward.2} parent=1 // pred_fallthru
      _
    // Predicated region
    $region18: #{autoshape_forward.2} parent=1 // pred_check
      _
    $region19: #{autoshape_forward.2} parent=1 // pred_check_branch
      %26 = sbr.rel (0) target = $region21
    $region20: #{autoshape_forward.2} parent=1 // pred_region
      _
    $region21: #{autoshape_forward.2} parent=1 // pred_fallthru
      _
    // Predicated region
    $region22: #{autoshape_forward.2} parent=1 // pred_check
      _
    $region23: #{autoshape_forward.2} parent=1 // pred_check_branch
      %28 = sbr.rel (0) target = $region25
    $region24: #{autoshape_forward.2} parent=1 // pred_region
      _
    $region25: #{autoshape_forward.2} parent=1 // pred_fallthru
      _
    // Predicated region
    $region26: #{autoshape_forward.2} parent=1 // pred_check
      _
    $region27: #{autoshape_forward.2} parent=1 // pred_check_branch
      %30 = sbr.rel (0) target = $region29
    $region28: #{autoshape_forward.2} parent=1 // pred_region
      _
    $region29: #{autoshape_forward.2} parent=1 // pred_fallthru
      _
    %v31 = vld [vmem:[%s6] ss:$0 sm:$0x1]
    %v32 = vunpack.c.0.s8 %v31
    %v33 = vunpack.c.1.s8 %v31
    %v34 = vunpack.c.2.s8 %v31
    %v35 = vunpack.c.3.s8 %v31
    %v36 = vand.u32 %v32, 255
    %v37 = vand.u32 %v33, 255
    %v38 = vand.u32 %v34, 255
    %v39 = vand.u32 %v35, 255
    %v40 = vlaneseq
    %v41 = vshrl.u32 %v40, 7
    %vm43 = vcmp.lt.s32.totalorder %v41, 3
    %v44 = vsel %vm43, %v36, %v16
    %v46 = vpack.c.b16 0, %v44
    %v47 = vpack.c.b8 0, %v46
    %48 = vst [vmem:[#allocation7] sm:$0x3] %v47
    %s49 = scalar_lea.vmem %s6, 1
    %v50 = vld [vmem:[%s49] ss:$0 sm:$0x1]
    %v51 = vunpack.c.0.s8 %v50
    %v52 = vunpack.c.1.s8 %v50
    %v53 = vunpack.c.2.s8 %v50
    %v54 = vunpack.c.3.s8 %v50
    %v55 = vand.u32 %v51, 255
    %v56 = vand.u32 %v52, 255
    %v57 = vand.u32 %v53, 255
    %v58 = vand.u32 %v54, 255
    %v59 = vlaneseq
    %v60 = vshrl.u32 %v59, 7
    %vm62 = vcmp.lt.s32.totalorder %v60, 3
    %v63 = vsel %vm62, %v55, %v16
    %s64 = scalar_lea.vmem [#allocation7], 2
    %v66 = vpack.c.b16 0, %v63
    %v67 = vpack.c.b8 0, %v66
    %68 = vst [vmem:[%s64] sm:$0x3] %v67
    %s69 = scalar_lea.vmem %s6, 2
    %v70 = vld [vmem:[%s69] ss:$0 sm:$0x1]
    %v71 = vunpack.c.0.s8 %v70
    %v72 = vunpack.c.1.s8 %v70
    %v73 = vunpack.c.2.s8 %v70
    %v74 = vunpack.c.3.s8 %v70
    %v75 = vand.u32 %v71, 255
    %v76 = vand.u32 %v72, 255
    %v77 = vand.u32 %v73, 255
    %v78 = vand.u32 %v74, 255
    %v79 = vlaneseq
    %v80 = vshrl.u32 %v79, 7
    %vm82 = vcmp.lt.s32.totalorder %v80, 3
    %v83 = vsel %vm82, %v75, %v16
    %s84 = scalar_lea.vmem [#allocation7], 4
    %v86 = vpack.c.b16 0, %v83
    %v87 = vpack.c.b8 0, %v86
    %88 = vst [vmem:[%s84] sm:$0x3] %v87
    %s89 = scalar_lea.vmem %s6, 3
    %v90 = vld [vmem:[%s89] ss:$0 sm:$0x1]
    %v91 = vunpack.c.0.s8 %v90
    %v92 = vunpack.c.1.s8 %v90
    %v93 = vunpack.c.2.s8 %v90
    %v94 = vunpack.c.3.s8 %v90
    %v95 = vand.u32 %v91, 255
    %v96 = vand.u32 %v92, 255
    %v97 = vand.u32 %v93, 255
    %v98 = vand.u32 %v94, 255
    %v99 = vlaneseq
    %v100 = vshrl.u32 %v99, 7
    %vm102 = vcmp.lt.s32.totalorder %v100, 3
    %v103 = vsel %vm102, %v95, %v16
    %s104 = scalar_lea.vmem [#allocation7], 6
    %v106 = vpack.c.b16 0, %v103
    %v107 = vpack.c.b8 0, %v106
    %108 = vst [vmem:[%s104] sm:$0x3] %v107
    %v110 = vld [vmem:[#allocation7] sm:$0xff]
    %v111 = vunpack.c.l.u8.bf16 %v110
    %v112 = vunpack.c.h.u8.bf16 %v110
    %v113 = vld [vmem:[%s0] sm:$0xf]
    %v114 = vld [vmem:[%s0 + $0x4] sm:$0xf]
    %v115 = vld [vmem:[%s1] sm:$0xff]
    %v116 = vld [vmem:[%s1 + $0x8] sm:$0xff]
    %118 = vset.pattern.permute.xlu0 0
    %119 = vperm.xlu0 %118, %v115
    %v120 = vpop.permute.xlu0 %119
    %123 = vset.pattern.permute.xlu0 0
    %124 = vperm.xlu0 %123, %v116
    %v125 = vpop.permute.xlu0 %124
    %v129 = vunpack.c.l.b16 %v113
    %v130 = vunpack.c.l.b16 %v114
    %v131 = vpack.c.b16 %v130, %v129
    %v134 = vunpack.c.l.b16 %v111
    %v135 = vunpack.c.h.b16 %v111
    %v136 = vunpack.c.l.b16 %v112
    %v137 = vunpack.c.h.b16 %v112
    %v138 = vpack.c.b16 %v134, %v134
    %v139 = vpack.c.b16 %v135, %v135
    %v140 = vpack.c.b16 %v136, %v136
    %v141 = vpack.c.b16 %v137, %v137
    %vm142 = vcmask 64512
    %v144 = vsel %vm142, %v131, 0
    %vm146 = vcmask 1043456
    %v148 = vsel %vm146, %v138, 0
    %v151 = vsel %vm146, %v139, 0
    %v154 = vsel %vm146, %v140, 0
    %v157 = vsel %vm146, %v141, 0
    %159 = vmatprep.subr.bf16.mxu0 %v151
    %160 = vmatpush1.bf16.msra.mxu0 %v148
    %161 = vmatprep.subr.bf16.mxu0 0
    %162 = vmatpush1.bf16.msra.mxu0 0
    %163 = vmatprep.subr.bf16.mxu0 0
    %164 = vmatpush1.bf16.msra.mxu0 0
    %165 = vmatprep.subr.bf16.mxu0 0
    %166 = vmatpush1.bf16.msra.mxu0 0
    %167 = vmatprep.subr.bf16.mxu0 0
    %168 = vmatpush1.bf16.msra.mxu0 0
    %169 = vmatprep.subr.bf16.mxu0 0
    %170 = vmatpush1.bf16.msra.mxu0 0
    %171 = vmatprep.subr.bf16.mxu0 0
    %172 = vmatpush1.bf16.msra.mxu0 0
    %173 = vmatprep.subr.bf16.mxu0 0
    %174 = vmatpush1.bf16.msra.mxu0 0
    %175 = vmatprep.subr.bf16.mxu0 0
    %176 = vmatpush1.bf16.msra.mxu0 0
    %177 = vmatprep.subr.bf16.mxu0 0
    %178 = vmatpush1.bf16.msra.mxu0 0
    %179 = vmatprep.subr.bf16.mxu0 0
    %180 = vmatpush1.bf16.msra.mxu0 0
    %181 = vmatprep.subr.bf16.mxu0 0
    %182 = vmatpush1.bf16.msra.mxu0 0
    %183 = vmatprep.subr.bf16.mxu0 0
    %184 = vmatpush1.bf16.msra.mxu0 0
    %185 = vmatprep.subr.bf16.mxu0 0
    %186 = vmatpush1.bf16.msra.mxu0 0
    %187 = vmatprep.subr.bf16.mxu0 0
    %188 = vmatpush1.bf16.msra.mxu0 0
    %189 = vmatprep.subr.bf16.mxu0 0
    %190 = vmatpush1.bf16.msra.mxu0 0
    %191 = vmatprep.mubr.bf16.mxu0 0
    %192 = vmatmul.mubr.bf16.gmra.mrb[0].mxu0 %v144
    %v193 = vpop.f32.mrb[0].mxu0
    %v194 = vadd.f32 %v120, %v193
    %v195 = vpop.f32.mrb[0].mxu0
    %v196 = vadd.f32 %v120, %v195
    %v197 = vpop.f32.mrb[0].mxu0
    %v198 = vadd.f32 %v125, %v197
    %v199 = vpop.f32.mrb[0].mxu0
    %v200 = vadd.f32 %v125, %v199
    %201 = vdwg.mxu0
    %202 = vmatprep.subr.bf16.mxu0 %v157
    %203 = vmatpush1.bf16.msra.mxu0 %v154
    %204 = vmatprep.subr.bf16.mxu0 0
    %205 = vmatpush1.bf16.msra.mxu0 0
    %206 = vmatprep.subr.bf16.mxu0 0
    %207 = vmatpush1.bf16.msra.mxu0 0
    %208 = vmatprep.subr.bf16.mxu0 0
    %209 = vmatpush1.bf16.msra.mxu0 0
    %210 = vmatprep.subr.bf16.mxu0 0
    %211 = vmatpush1.bf16.msra.mxu0 0
    %212 = vmatprep.subr.bf16.mxu0 0
    %213 = vmatpush1.bf16.msra.mxu0 0
    %214 = vmatprep.subr.bf16.mxu0 0
    %215 = vmatpush1.bf16.msra.mxu0 0
    %216 = vmatprep.subr.bf16.mxu0 0
    %217 = vmatpush1.bf16.msra.mxu0 0
    %218 = vmatprep.subr.bf16.mxu0 0
    %219 = vmatpush1.bf16.msra.mxu0 0
    %220 = vmatprep.subr.bf16.mxu0 0
    %221 = vmatpush1.bf16.msra.mxu0 0
    %222 = vmatprep.subr.bf16.mxu0 0
    %223 = vmatpush1.bf16.msra.mxu0 0
    %224 = vmatprep.subr.bf16.mxu0 0
    %225 = vmatpush1.bf16.msra.mxu0 0
    %226 = vmatprep.subr.bf16.mxu0 0
    %227 = vmatpush1.bf16.msra.mxu0 0
    %228 = vmatprep.subr.bf16.mxu0 0
    %229 = vmatpush1.bf16.msra.mxu0 0
    %230 = vmatprep.subr.bf16.mxu0 0
    %231 = vmatpush1.bf16.msra.mxu0 0
    %232 = vmatprep.subr.bf16.mxu0 0
    %233 = vmatpush1.bf16.msra.mxu0 0
    %234 = vmatprep.mubr.bf16.mxu0 0
    %235 = vmatmul.mubr.bf16.gmra.mrb[0].mxu0 %v144
    %v236 = vpop.f32.mrb[0].mxu0
    %v237 = vadd.f32 %v120, %v236
    %v238 = vpop.f32.mrb[0].mxu0
    %v239 = vadd.f32 %v120, %v238
    %v240 = vpop.f32.mrb[0].mxu0
    %v241 = vadd.f32 %v125, %v240
    %v242 = vpop.f32.mrb[0].mxu0
    %v243 = vadd.f32 %v125, %v242
    %244 = vdwg.mxu0
    %v245 = vxor.u32 %v194, 2147483648
    %v246 = vxor.u32 %v196, 2147483648
    %v247 = vxor.u32 %v237, 2147483648
    %v248 = vxor.u32 %v239, 2147483648
    %v249 = vxor.u32 %v198, 2147483648
    %v250 = vxor.u32 %v200, 2147483648
    %v251 = vxor.u32 %v241, 2147483648
    %v252 = vxor.u32 %v243, 2147483648
    %v253 = vmul.f32 %v245, 1.442695
    %v254 = vpow.pop %v253
    %v255 = vmul.f32 %v246, 1.442695
    %v256 = vpow.pop %v255
    %v257 = vmul.f32 %v247, 1.442695
    %v258 = vpow.pop %v257
    %v259 = vmul.f32 %v248, 1.442695
    %v260 = vpow.pop %v259
    %v261 = vmul.f32 %v249, 1.442695
    %v262 = vpow.pop %v261
    %v263 = vmul.f32 %v250, 1.442695
    %v264 = vpow.pop %v263
    %v265 = vmul.f32 %v251, 1.442695
    %v266 = vpow.pop %v265
    %v267 = vmul.f32 %v252, 1.442695
    %v268 = vpow.pop %v267
    %v269 = vadd.f32 %v254, 1.0
    %v270 = vadd.f32 %v256, 1.0
    %v271 = vadd.f32 %v258, 1.0
    %v272 = vadd.f32 %v260, 1.0
    %v273 = vadd.f32 %v262, 1.0
    %v274 = vadd.f32 %v264, 1.0
    %v275 = vadd.f32 %v266, 1.0
    %v276 = vadd.f32 %v268, 1.0
    %v277 = vrcp.pop %v269
    %v278 = vmul.f32 1.0, %v277
    %v279 = vrcp.pop %v270
    %v280 = vmul.f32 1.0, %v279
    %v281 = vrcp.pop %v271
    %v282 = vmul.f32 1.0, %v281
    %v283 = vrcp.pop %v272
    %v284 = vmul.f32 1.0, %v283
    %v285 = vrcp.pop %v273
    %v286 = vmul.f32 1.0, %v285
    %v287 = vrcp.pop %v274
    %v288 = vmul.f32 1.0, %v287
    %v289 = vrcp.pop %v275
    %v290 = vmul.f32 1.0, %v289
    %v291 = vrcp.pop %v276
    %v292 = vmul.f32 1.0, %v291
    %v293 = vld [vmem:[%s2] sm:$0xf]
    %vm294 = vcmask 130048
    %v296 = vsel %vm294, %v293, 0
    %298 = vmatprep.subr.mxu0 %v280
    %299 = vmatpush1.msra.mxu0 %v278
    %300 = vmatprep.subr.mxu0 %v288
    %301 = vmatpush1.msra.mxu0 %v286
    %302 = vmatprep.subr.mxu0 0.0
    %303 = vmatpush1.msra.mxu0 0.0
    %304 = vmatprep.subr.mxu0 0.0
    %305 = vmatpush1.msra.mxu0 0.0
    %306 = vmatprep.subr.mxu0 0.0
    %307 = vmatpush1.msra.mxu0 0.0
    %308 = vmatprep.subr.mxu0 0.0
    %309 = vmatpush1.msra.mxu0 0.0
    %310 = vmatprep.subr.mxu0 0.0
    %311 = vmatpush1.msra.mxu0 0.0
    %312 = vmatprep.subr.mxu0 0.0
    %313 = vmatpush1.msra.mxu0 0.0
    %314 = vmatprep.subr.mxu0 0.0
    %315 = vmatpush1.msra.mxu0 0.0
    %316 = vmatprep.subr.mxu0 0.0
    %317 = vmatpush1.msra.mxu0 0.0
    %318 = vmatprep.subr.mxu0 0.0
    %319 = vmatpush1.msra.mxu0 0.0
    %320 = vmatprep.subr.mxu0 0.0
    %321 = vmatpush1.msra.mxu0 0.0
    %322 = vmatprep.subr.mxu0 0.0
    %323 = vmatpush1.msra.mxu0 0.0
    %324 = vmatprep.subr.mxu0 0.0
    %325 = vmatpush1.msra.mxu0 0.0
    %326 = vmatprep.subr.mxu0 0.0
    %327 = vmatpush1.msra.mxu0 0.0
    %328 = vmatprep.subr.mxu0 0.0
    %329 = vmatpush1.msra.mxu0 0.0
    %330 = vmatprep.subr.mxu0 0.0
    %331 = vmatpush1.msra.mxu0 0.0
    %332 = vmatprep.subr.mxu0 0.0
    %333 = vmatpush1.msra.mxu0 0.0
    %334 = vmatprep.subr.mxu0 0.0
    %335 = vmatpush1.msra.mxu0 0.0
    %336 = vmatprep.subr.mxu0 0.0
    %337 = vmatpush1.msra.mxu0 0.0
    %338 = vmatprep.subr.mxu0 0.0
    %339 = vmatpush1.msra.mxu0 0.0
    %340 = vmatprep.subr.mxu0 0.0
    %341 = vmatpush1.msra.mxu0 0.0
    %342 = vmatprep.subr.mxu0 0.0
    %343 = vmatpush1.msra.mxu0 0.0
    %344 = vmatprep.subr.mxu0 0.0
    %345 = vmatpush1.msra.mxu0 0.0
    %346 = vmatprep.subr.mxu0 0.0
    %347 = vmatpush1.msra.mxu0 0.0
    %348 = vmatprep.subr.mxu0 0.0
    %349 = vmatpush1.msra.mxu0 0.0
    %350 = vmatprep.subr.mxu0 0.0
    %351 = vmatpush1.msra.mxu0 0.0
    %352 = vmatprep.subr.mxu0 0.0
    %353 = vmatpush1.msra.mxu0 0.0
    %354 = vmatprep.subr.mxu0 0.0
    %355 = vmatpush1.msra.mxu0 0.0
    %356 = vmatprep.subr.mxu0 0.0
    %357 = vmatpush1.msra.mxu0 0.0
    %358 = vmatprep.subr.mxu0 0.0
    %359 = vmatpush1.msra.mxu0 0.0
    %360 = vmatprep.subr.mxu0 0.0
    %361 = vmatpush1.msra.mxu0 0.0
    %362 = vmatprep.mubr.f32.mxu0 0.0
    %363 = vmatmul.mubr.f32.gmra.mrb[0].mxu0 %v296
    %v364 = vpop.f32.mrb[0].mxu0
    %v365 = vadd.f32 0.0, %v364
    %v366 = vpop.f32.mrb[0].mxu0
    %v367 = vadd.f32 0.0, %v366
    %368 = vdwg.mxu0
    %369 = vmatprep.subr.mxu0 %v284
    %370 = vmatpush1.msra.mxu0 %v282
    %371 = vmatprep.subr.mxu0 %v292
    %372 = vmatpush1.msra.mxu0 %v290
    %373 = vmatprep.subr.mxu0 0.0
    %374 = vmatpush1.msra.mxu0 0.0
    %375 = vmatprep.subr.mxu0 0.0
    %376 = vmatpush1.msra.mxu0 0.0
    %377 = vmatprep.subr.mxu0 0.0
    %378 = vmatpush1.msra.mxu0 0.0
    %379 = vmatprep.subr.mxu0 0.0
    %380 = vmatpush1.msra.mxu0 0.0
    %381 = vmatprep.subr.mxu0 0.0
    %382 = vmatpush1.msra.mxu0 0.0
    %383 = vmatprep.subr.mxu0 0.0
    %384 = vmatpush1.msra.mxu0 0.0
    %385 = vmatprep.subr.mxu0 0.0
    %386 = vmatpush1.msra.mxu0 0.0
    %387 = vmatprep.subr.mxu0 0.0
    %388 = vmatpush1.msra.mxu0 0.0
    %389 = vmatprep.subr.mxu0 0.0
    %390 = vmatpush1.msra.mxu0 0.0
    %391 = vmatprep.subr.mxu0 0.0
    %392 = vmatpush1.msra.mxu0 0.0
    %393 = vmatprep.subr.mxu0 0.0
    %394 = vmatpush1.msra.mxu0 0.0
    %395 = vmatprep.subr.mxu0 0.0
    %396 = vmatpush1.msra.mxu0 0.0
    %397 = vmatprep.subr.mxu0 0.0
    %398 = vmatpush1.msra.mxu0 0.0
    %399 = vmatprep.subr.mxu0 0.0
    %400 = vmatpush1.msra.mxu0 0.0
    %401 = vmatprep.subr.mxu0 0.0
    %402 = vmatpush1.msra.mxu0 0.0
    %403 = vmatprep.subr.mxu0 0.0
    %404 = vmatpush1.msra.mxu0 0.0
    %405 = vmatprep.subr.mxu0 0.0
    %406 = vmatpush1.msra.mxu0 0.0
    %407 = vmatprep.subr.mxu0 0.0
    %408 = vmatpush1.msra.mxu0 0.0
    %409 = vmatprep.subr.mxu0 0.0
    %410 = vmatpush1.msra.mxu0 0.0
    %411 = vmatprep.subr.mxu0 0.0
    %412 = vmatpush1.msra.mxu0 0.0
    %413 = vmatprep.subr.mxu0 0.0
    %414 = vmatpush1.msra.mxu0 0.0
    %415 = vmatprep.subr.mxu0 0.0
    %416 = vmatpush1.msra.mxu0 0.0
    %417 = vmatprep.subr.mxu0 0.0
    %418 = vmatpush1.msra.mxu0 0.0
    %419 = vmatprep.subr.mxu0 0.0
    %420 = vmatpush1.msra.mxu0 0.0
    %421 = vmatprep.subr.mxu0 0.0
    %422 = vmatpush1.msra.mxu0 0.0
    %423 = vmatprep.subr.mxu0 0.0
    %424 = vmatpush1.msra.mxu0 0.0
    %425 = vmatprep.subr.mxu0 0.0
    %426 = vmatpush1.msra.mxu0 0.0
    %427 = vmatprep.subr.mxu0 0.0
    %428 = vmatpush1.msra.mxu0 0.0
    %429 = vmatprep.subr.mxu0 0.0
    %430 = vmatpush1.msra.mxu0 0.0
    %431 = vmatprep.subr.mxu0 0.0
    %432 = vmatpush1.msra.mxu0 0.0
    %433 = vmatprep.mubr.f32.mxu0 0.0
    %434 = vmatmul.mubr.f32.gmra.mrb[0].mxu0 %v296
    %v435 = vpop.f32.mrb[0].mxu0
    %v436 = vadd.f32 0.0, %v435
    %v437 = vpop.f32.mrb[0].mxu0
    %v438 = vadd.f32 0.0, %v437
    %439 = vdwg.mxu0
    %v440 = vmax.f32 %v365, 0.0
    %v441 = vmax.f32 %v367, 0.0
    %v442 = vmax.f32 %v436, 0.0
    %v443 = vmax.f32 %v438, 0.0
    %v444 = vld [vmem:[%s4] sm:$0xf]
    %446 = vset.pattern.permute.xlu0 0
    %447 = vperm.xlu0 %446, %v444
    %v448 = vpop.permute.xlu0 %447
    %v450 = vmin.f32 %v440, %v448
    %v451 = vmin.f32 %v441, %v448
    %v452 = vmin.f32 %v442, %v448
    %v453 = vmin.f32 %v443, %v448
    %v458 = vrot.slane %v278, 7
    %v459 = vrot.slane %v280, 7
    %v460 = vrot.slane %v282, 7
    %v461 = vrot.slane %v284, 7
    %vm466 = vcmp.gt.f32.partialorder %v278, %v458
    %vm467 = vcmp.gt.f32.partialorder %v280, %v459
    %vm468 = vcmp.gt.f32.partialorder %v282, %v460
    %vm469 = vcmp.gt.f32.partialorder %v284, %v461
    %v470 = vsel %vm466, %v278, %v458
    %v471 = vsel %vm467, %v280, %v459
    %v472 = vsel %vm468, %v282, %v460
    %v473 = vsel %vm469, %v284, %v461
    %v474 = vsel %vm466, 1.0, 0.0
    %v475 = vsel %vm467, 1.0, 0.0
    %v476 = vsel %vm468, 1.0, 0.0
    %v477 = vsel %vm469, 1.0, 0.0
    %v482 = vrot.slane %v470, 7
    %v483 = vrot.slane %v471, 7
    %v484 = vrot.slane %v472, 7
    %v485 = vrot.slane %v473, 7
    %vm490 = vcmp.gt.f32.partialorder %v278, %v482
    %vm491 = vcmp.gt.f32.partialorder %v280, %v483
    %vm492 = vcmp.gt.f32.partialorder %v282, %v484
    %vm493 = vcmp.gt.f32.partialorder %v284, %v485
    %v494 = vsel %vm490, %v278, %v482
    %v495 = vsel %vm491, %v280, %v483
    %v496 = vsel %vm492, %v282, %v484
    %v497 = vsel %vm493, %v284, %v485
    %v502 = vrot.slane %v474, 7
    %v503 = vrot.slane %v475, 7
    %v504 = vrot.slane %v476, 7
    %v505 = vrot.slane %v477, 7
    %v510 = vsel %vm490, 2.0, %v502
    %v511 = vsel %vm491, 2.0, %v503
    %v512 = vsel %vm492, 2.0, %v504
    %v513 = vsel %vm493, 2.0, %v505
    %v518 = vrot.slane %v494, 7
    %v519 = vrot.slane %v495, 7
    %v520 = vrot.slane %v496, 7
    %v521 = vrot.slane %v497, 7
    %vm526 = vcmp.gt.f32.partialorder %v286, %v518
    %vm527 = vcmp.gt.f32.partialorder %v288, %v519
    %vm528 = vcmp.gt.f32.partialorder %v290, %v520
    %vm529 = vcmp.gt.f32.partialorder %v292, %v521
    %v530 = vsel %vm526, %v286, %v518
    %v531 = vsel %vm527, %v288, %v519
    %v532 = vsel %vm528, %v290, %v520
    %v533 = vsel %vm529, %v292, %v521
    %v538 = vrot.slane %v510, 7
    %v539 = vrot.slane %v511, 7
    %v540 = vrot.slane %v512, 7
    %v541 = vrot.slane %v513, 7
    %v546 = vsel %vm526, 3.0, %v538
    %v547 = vsel %vm527, 3.0, %v539
    %v548 = vsel %vm528, 3.0, %v540
    %v549 = vsel %vm529, 3.0, %v541
    %v554 = vrot.slane %v530, 4
    %v555 = vrot.slane %v531, 4
    %v556 = vrot.slane %v532, 4
    %v557 = vrot.slane %v533, 4
    %v562 = vmul.f32 %v278, %v554
    %v563 = vmul.f32 %v280, %v555
    %v564 = vmul.f32 %v282, %v556
    %v565 = vmul.f32 %v284, %v557
    %v570 = vrot.slane %v546, 3
    %v571 = vrot.slane %v547, 3
    %v572 = vrot.slane %v548, 3
    %v573 = vrot.slane %v549, 3
    %v578 = vsel %vm146, %v450, %v562
    %v579 = vsel %vm146, %v451, %v563
    %v580 = vsel %vm146, %v452, %v564
    %v581 = vsel %vm146, %v453, %v565
    %vm582 = vcmask 1044480
    %v583 = vsel %vm582, %v578, %v570
    %v584 = vsel %vm582, %v579, %v571
    %v585 = vsel %vm582, %v580, %v572
    %v586 = vsel %vm582, %v581, %v573
    %vm587 = vcmask 1045504
    %v588 = vsel %vm587, %v583, 0.0
    %v589 = vsel %vm587, %v584, 0.0
    %v590 = vsel %vm587, %v585, 0.0
    %v591 = vsel %vm587, %v586, 0.0
    %vm592 = vcmask 1046528
    %v593 = vsel %vm592, %v588, 0.0
    %v594 = vsel %vm592, %v589, 0.0
    %v595 = vsel %vm592, %v590, 0.0
    %v596 = vsel %vm592, %v591, 0.0
    %v597 = vld [vmem:[%s3] sm:$0xff]
    %v599 = vsel %vm142, %v597, 0
    %601 = vmatprep.subr.mxu0 %v594
    %602 = vmatpush1.msra.mxu0 %v593
    %603 = vmatprep.subr.mxu0 0.0
    %604 = vmatpush1.msra.mxu0 0.0
    %605 = vmatprep.subr.mxu0 0.0
    %606 = vmatpush1.msra.mxu0 0.0
    %607 = vmatprep.subr.mxu0 0.0
    %608 = vmatpush1.msra.mxu0 0.0
    %609 = vmatprep.subr.mxu0 0.0
    %610 = vmatpush1.msra.mxu0 0.0
    %611 = vmatprep.subr.mxu0 0.0
    %612 = vmatpush1.msra.mxu0 0.0
    %613 = vmatprep.subr.mxu0 0.0
    %614 = vmatpush1.msra.mxu0 0.0
    %615 = vmatprep.subr.mxu0 0.0
    %616 = vmatpush1.msra.mxu0 0.0
    %617 = vmatprep.subr.mxu0 0.0
    %618 = vmatpush1.msra.mxu0 0.0
    %619 = vmatprep.subr.mxu0 0.0
    %620 = vmatpush1.msra.mxu0 0.0
    %621 = vmatprep.subr.mxu0 0.0
    %622 = vmatpush1.msra.mxu0 0.0
    %623 = vmatprep.subr.mxu0 0.0
    %624 = vmatpush1.msra.mxu0 0.0
    %625 = vmatprep.subr.mxu0 0.0
    %626 = vmatpush1.msra.mxu0 0.0
    %627 = vmatprep.subr.mxu0 0.0
    %628 = vmatpush1.msra.mxu0 0.0
    %629 = vmatprep.subr.mxu0 0.0
    %630 = vmatpush1.msra.mxu0 0.0
    %631 = vmatprep.subr.mxu0 0.0
    %632 = vmatpush1.msra.mxu0 0.0
    %633 = vmatprep.subr.mxu0 0.0
    %634 = vmatpush1.msra.mxu0 0.0
    %635 = vmatprep.subr.mxu0 0.0
    %636 = vmatpush1.msra.mxu0 0.0
    %637 = vmatprep.subr.mxu0 0.0
    %638 = vmatpush1.msra.mxu0 0.0
    %639 = vmatprep.subr.mxu0 0.0
    %640 = vmatpush1.msra.mxu0 0.0
    %641 = vmatprep.subr.mxu0 0.0
    %642 = vmatpush1.msra.mxu0 0.0
    %643 = vmatprep.subr.mxu0 0.0
    %644 = vmatpush1.msra.mxu0 0.0
    %645 = vmatprep.subr.mxu0 0.0
    %646 = vmatpush1.msra.mxu0 0.0
    %647 = vmatprep.subr.mxu0 0.0
    %648 = vmatpush1.msra.mxu0 0.0
    %649 = vmatprep.subr.mxu0 0.0
    %650 = vmatpush1.msra.mxu0 0.0
    %651 = vmatprep.subr.mxu0 0.0
    %652 = vmatpush1.msra.mxu0 0.0
    %653 = vmatprep.subr.mxu0 0.0
    %654 = vmatpush1.msra.mxu0 0.0
    %655 = vmatprep.subr.mxu0 0.0
    %656 = vmatpush1.msra.mxu0 0.0
    %657 = vmatprep.subr.mxu0 0.0
    %658 = vmatpush1.msra.mxu0 0.0
    %659 = vmatprep.subr.mxu0 0.0
    %660 = vmatpush1.msra.mxu0 0.0
    %661 = vmatprep.subr.mxu0 0.0
    %662 = vmatpush1.msra.mxu0 0.0
    %663 = vmatprep.subr.mxu0 0.0
    %664 = vmatpush1.msra.mxu0 0.0
    %665 = vmatprep.mubr.f32.mxu0 0.0
    %666 = vmatmul.mubr.f32.gmra.mrb[0].mxu0 %v599
    %v667 = vpop.f32.mrb[0].mxu0
    %v668 = vadd.f32 0.0, %v667
    %v669 = vpop.f32.mrb[0].mxu0
    %v670 = vadd.f32 0.0, %v669
    %671 = vdwg.mxu0
    %672 = vmatprep.subr.mxu0 %v596
    %673 = vmatpush1.msra.mxu0 %v595
    %674 = vmatprep.subr.mxu0 0.0
    %675 = vmatpush1.msra.mxu0 0.0
    %676 = vmatprep.subr.mxu0 0.0
    %677 = vmatpush1.msra.mxu0 0.0
    %678 = vmatprep.subr.mxu0 0.0
    %679 = vmatpush1.msra.mxu0 0.0
    %680 = vmatprep.subr.mxu0 0.0
    %681 = vmatpush1.msra.mxu0 0.0
    %682 = vmatprep.subr.mxu0 0.0
    %683 = vmatpush1.msra.mxu0 0.0
    %684 = vmatprep.subr.mxu0 0.0
    %685 = vmatpush1.msra.mxu0 0.0
    %686 = vmatprep.subr.mxu0 0.0
    %687 = vmatpush1.msra.mxu0 0.0
    %688 = vmatprep.subr.mxu0 0.0
    %689 = vmatpush1.msra.mxu0 0.0
    %690 = vmatprep.subr.mxu0 0.0
    %691 = vmatpush1.msra.mxu0 0.0
    %692 = vmatprep.subr.mxu0 0.0
    %693 = vmatpush1.msra.mxu0 0.0
    %694 = vmatprep.subr.mxu0 0.0
    %695 = vmatpush1.msra.mxu0 0.0
    %696 = vmatprep.subr.mxu0 0.0
    %697 = vmatpush1.msra.mxu0 0.0
    %698 = vmatprep.subr.mxu0 0.0
    %699 = vmatpush1.msra.mxu0 0.0
    %700 = vmatprep.subr.mxu0 0.0
    %701 = vmatpush1.msra.mxu0 0.0
    %702 = vmatprep.subr.mxu0 0.0
    %703 = vmatpush1.msra.mxu0 0.0
    %704 = vmatprep.subr.mxu0 0.0
    %705 = vmatpush1.msra.mxu0 0.0
    %706 = vmatprep.subr.mxu0 0.0
    %707 = vmatpush1.msra.mxu0 0.0
    %708 = vmatprep.subr.mxu0 0.0
    %709 = vmatpush1.msra.mxu0 0.0
    %710 = vmatprep.subr.mxu0 0.0
    %711 = vmatpush1.msra.mxu0 0.0
    %712 = vmatprep.subr.mxu0 0.0
    %713 = vmatpush1.msra.mxu0 0.0
    %714 = vmatprep.subr.mxu0 0.0
    %715 = vmatpush1.msra.mxu0 0.0
    %716 = vmatprep.subr.mxu0 0.0
    %717 = vmatpush1.msra.mxu0 0.0
    %718 = vmatprep.subr.mxu0 0.0
    %719 = vmatpush1.msra.mxu0 0.0
    %720 = vmatprep.subr.mxu0 0.0
    %721 = vmatpush1.msra.mxu0 0.0
    %722 = vmatprep.subr.mxu0 0.0
    %723 = vmatpush1.msra.mxu0 0.0
    %724 = vmatprep.subr.mxu0 0.0
    %725 = vmatpush1.msra.mxu0 0.0
    %726 = vmatprep.subr.mxu0 0.0
    %727 = vmatpush1.msra.mxu0 0.0
    %728 = vmatprep.subr.mxu0 0.0
    %729 = vmatpush1.msra.mxu0 0.0
    %730 = vmatprep.subr.mxu0 0.0
    %731 = vmatpush1.msra.mxu0 0.0
    %732 = vmatprep.subr.mxu0 0.0
    %733 = vmatpush1.msra.mxu0 0.0
    %734 = vmatprep.subr.mxu0 0.0
    %735 = vmatpush1.msra.mxu0 0.0
    %736 = vmatprep.mubr.f32.mxu0 0.0
    %737 = vmatmul.mubr.f32.gmra.mrb[0].mxu0 %v599
    %v738 = vpop.f32.mrb[0].mxu0
    %v739 = vadd.f32 0.0, %v738
    %v740 = vpop.f32.mrb[0].mxu0
    %v741 = vadd.f32 0.0, %v740
    %742 = vdwg.mxu0
    %v743 = vld [vmem:[%s5] sm:$0xff]
    %v744 = vld [vmem:[%s5 + $0x8] sm:$0xff]
    %746 = vset.pattern.permute.xlu0 0
    %747 = vperm.xlu0 %746, %v743
    %v748 = vpop.permute.xlu0 %747
    %751 = vset.pattern.permute.xlu0 0
    %752 = vperm.xlu0 %751, %v744
    %v753 = vpop.permute.xlu0 %752
    %v755 = vmul.f32 %v593, %v748
    %v756 = vmul.f32 %v594, %v748
    %v757 = vmul.f32 %v595, %v748
    %v758 = vmul.f32 %v596, %v748
    %v759 = vmul.f32 %v668, %v753
    %v760 = vmul.f32 %v670, %v753
    %v761 = vmul.f32 %v739, %v753
    %v762 = vmul.f32 %v741, %v753
    %763 = vst [vmem:[%s8] sm:$0xff] %v593
    %764 = vst [vmem:[%s8 + $0x8] sm:$0xff] %v594
    %765 = vst [vmem:[%s8 + $0x10] sm:$0xff] %v595
    %766 = vst [vmem:[%s8 + $0x18] sm:$0xff] %v596
    %767 = vst [vmem:[%s8 + $0x20] sm:$0xff] %v668
    %768 = vst [vmem:[%s8 + $0x28] sm:$0xff] %v670
    %769 = vst [vmem:[%s8 + $0x30] sm:$0xff] %v739
    %770 = vst [vmem:[%s8 + $0x38] sm:$0xff] %v741
    %771 = vst [vmem:[%s8 + $0x40] sm:$0xff] %v755
    %772 = vst [vmem:[%s8 + $0x48] sm:$0xff] %v756
    %773 = vst [vmem:[%s8 + $0x50] sm:$0xff] %v757
    %774 = vst [vmem:[%s8 + $0x58] sm:$0xff] %v758
    %775 = vst [vmem:[%s8 + $0x60] sm:$0xff] %v759
    %776 = vst [vmem:[%s8 + $0x68] sm:$0xff] %v760
    %777 = vst [vmem:[%s8 + $0x70] sm:$0xff] %v761
    %778 = vst [vmem:[%s8 + $0x78] sm:$0xff] %v762
    // Predicated region
    $region30: #{autoshape_forward.2} parent=1 // pred_check
      _
    $region31: #{autoshape_forward.2} parent=1 // pred_check_branch
      %780 = sbr.rel (0) target = $region33
    $region32: #{autoshape_forward.2} parent=1 // pred_region
      _
    $region33: #{autoshape_forward.2} parent=1 // pred_fallthru
      _
    // Predicated region
    $region34: #{autoshape_forward.2} parent=1 // pred_check
      _
    $region35: #{autoshape_forward.2} parent=1 // pred_check_branch
      %782 = sbr.rel (0) target = $region37
    $region36: #{autoshape_forward.2} parent=1 // pred_region
      _
    $region37: #{autoshape_forward.2} parent=1 // pred_fallthru
      _

</llo_original>
